<compile_context>
chip_gen: v5e
topology: v5e:2x2
jax: 0.10.0
libtpu: 0.0.40
codegen_flags: <defaults>
</compile_context>

<pallas_src>
import functools

import jax
import jax.numpy as jnp
from jax.experimental import pallas as pl
from jax.experimental.pallas import tpu as pltpu


def _round_up(a, m):
    return ((a + m - 1) // m) * m


def _topk_fft_kernel(x_ref, fwd_ref, inv_ref, xfft_ref, xres_ref, *, k, n_freq):
    eps = jnp.float32(1e-6)

    x = x_ref[...]          # (L, Nt)  f32 column tile (columns = flattened (b, c))
    fwd = fwd_ref[...]      # (2*Fp, L)  rows: [cos ; 0-pad ; -sin ; 0-pad]
    inv = inv_ref[...]      # (L, 2*Fp)  cols: [cos.T*w/L ; 0 ; -sin.T*w/L ; 0]

    f_pad = fwd.shape[0] // 2

    # ---- rfft(x, dim=time) as a single real-DFT matmul on the MXU ----
    y = jnp.dot(fwd, x, preferred_element_type=jnp.float32)      # (2*Fp, Nt) = [re ; im]
    re = y[:f_pad]                                                # (Fp, Nt)
    im = y[f_pad:]                                                # (Fp, Nt)

    # ---- squared amplitude (sqrt dropped: monotone, same top-k selection) ----
    amp2 = (re + eps) ** 2 + (im + eps) ** 2                      # (Fp, Nt)

    # ---- per-column top-k over the valid frequency rows ----
    Fp, Nt = amp2.shape
    row = jax.lax.broadcasted_iota(jnp.int32, (Fp, Nt), 0)
    neg_inf = jnp.float32(-jnp.inf)
    work = jnp.where(row < n_freq, amp2, neg_inf)   # padded freq rows never selected
    mask = jnp.zeros_like(amp2)
    for _ in range(k):  # k is small and static
        cur_max = jnp.max(work, axis=0, keepdims=True)            # (1, Nt)
        is_max = work == cur_max
        first_idx = jnp.min(jnp.where(is_max, row, Fp), axis=0, keepdims=True)
        sel = row == first_idx
        mask = jnp.where(sel, jnp.float32(1.0), mask)
        work = jnp.where(sel, neg_inf, work)

    # ---- masked irfft as a single inverse-DFT matmul (w & 1/L folded in inv) ----
    mask2 = jnp.concatenate([mask, mask], axis=0)                 # (2*Fp, Nt)
    rec = jnp.dot(inv, y * mask2, preferred_element_type=jnp.float32)  # (L, Nt)

    xfft_ref[...] = rec.astype(xfft_ref.dtype)
    xres_ref[...] = (x - rec).astype(xres_ref.dtype)


def topk_fft_decomp(x, k):
    """x: (B, L, C) float32, L even.  Returns (x_fft, x_res), both (B, L, C)."""
    B, L, C = x.shape
    assert L % 2 == 0, "irfft round-trip to the same length requires even L"
    Fn = L // 2 + 1
    assert k <= Fn, "k must not exceed the number of rfft frequencies"
    Fp = _round_up(Fn, 8)          # sublane-align the frequency axis

    # ----- DFT bases (trace-time constants) -----
    t = jnp.arange(L, dtype=jnp.float32)
    f = jnp.arange(Fn, dtype=jnp.float32)
    ang = (2.0 * jnp.pi / L) * jnp.outer(f, t)                    # (Fn, L)
    cosm = jnp.cos(ang)
    sinm = jnp.sin(ang)
    w = jnp.ones((Fn, 1), jnp.float32).at[1:Fn - 1].set(2.0)      # irfft weights

    # Forward basis (2*Fp, L): y = fwd @ x = [re ; im] stacked.
    fwd = jnp.zeros((2 * Fp, L), jnp.float32)
    fwd = fwd.at[:Fn].set(cosm)
    fwd = fwd.at[Fp:Fp + Fn].set(-sinm)

    # Inverse basis (L, 2*Fp) with irfft weights and 1/L folded into the columns.
    inv = jnp.zeros((L, 2 * Fp), jnp.float32)
    inv = inv.at[:, :Fn].set((cosm * w).T / L)
    inv = inv.at[:, Fp:Fp + Fn].set((-sinm * w).T / L)

    # ----- fold batch into the lane dim: (B, L, C) -> (L, B*C), pad lanes -----
    N = B * C
    x_cols = jnp.transpose(x, (1, 0, 2)).reshape(L, N)
    n128 = _round_up(N, 128)
    n_tile = 256 if (n128 >= 256 and n128 % 256 == 0) else 128    # lane-dense MXU N dim
    N_pad = _round_up(N, n_tile)
    if N_pad != N:
        x_cols = jnp.pad(x_cols, ((0, 0), (0, N_pad - N)))

    kernel = functools.partial(_topk_fft_kernel, k=k, n_freq=Fn)

    # VMEM budget: single-buffered bases + double-buffered in/out column tiles.
    basis_bytes = (fwd.size + inv.size) * 4
    tile_bytes = L * n_tile * 4
    vmem_limit = int(min(max(basis_bytes + 6 * tile_bytes + (8 << 20), 32 << 20),
                         128 << 20))

    def const_spec(shape):
        # Grid-invariant input: keep a single VMEM copy (no double buffering).
        return pl.BlockSpec(shape, lambda j: (0, 0), pipeline_mode=pl.Buffered(1))

    col_spec = pl.BlockSpec((L, n_tile), lambda j: (0, j))
    out_shape = jax.ShapeDtypeStruct((L, N_pad), x.dtype)

    x_fft_cols, x_res_cols = pl.pallas_call(
        kernel,
        out_shape=(out_shape, out_shape),
        grid_spec=pltpu.PrefetchScalarGridSpec(
            num_scalar_prefetch=0,
            grid=(N_pad // n_tile,),
            in_specs=[
                col_spec,                       # x columns
                const_spec((2 * Fp, L)),        # forward basis
                const_spec((L, 2 * Fp)),        # inverse basis (w, 1/L folded in)
            ],
            out_specs=[col_spec, col_spec],
        ),
        compiler_params=pltpu.CompilerParams(
            dimension_semantics=("parallel",),
            vmem_limit_bytes=vmem_limit),
    )(x_cols, fwd, inv)

    def uncols(y_cols):
        return jnp.transpose(y_cols[:, :N].reshape(L, B, C), (1, 0, 2))

    return uncols(x_fft_cols), uncols(x_res_cols)


def _reference(x, k):
    """Pure-JAX reference (jnp.fft), mirrors the torch module."""
    eps = 1e-6
    xf = jnp.fft.rfft(x, axis=1)
    amp = jnp.sqrt((xf.real + eps) ** 2 + (xf.imag + eps) ** 2)
    kth = jnp.sort(amp, axis=1)[:, -k, :][:, None, :]
    mask = (amp >= kth).astype(jnp.float32)                      # no ties w/ random data
    xf = xf * mask
    x_fft = jnp.fft.irfft(xf, n=x.shape[1], axis=1).astype(x.dtype)
    return x_fft, x - x_fft


if __name__ == "__main__":
    B, L, C, k = 2, 16, 8, 3
    key = jax.random.PRNGKey(0)
    x = jax.random.normal(key, (B, L, C), dtype=jnp.float32)

    x_fft, x_res = topk_fft_decomp(x, k)
    jax.block_until_ready((x_fft, x_res))

    # sanity check vs jnp.fft reference
    r_fft, r_res = _reference(x, k)
    assert jnp.allclose(x_fft, r_fft, atol=1e-3), "x_fft mismatch"
    assert jnp.allclose(x_res, r_res, atol=1e-3), "x_res mismatch"

    print("KERNEL_OK")
</pallas_src>

<mosaic_0001>
module attributes {stable_mosaic.version = 11 : i64} {
  func.func @_topk_fft_kernel(%arg0: i32, %arg1: memref<16x128xf32, #tpu.memory_space<vmem>>, %arg2: memref<32x16xf32, #tpu.memory_space<vmem>>, %arg3: memref<16x32xf32, #tpu.memory_space<vmem>>, %arg4: memref<16x128xf32, #tpu.memory_space<vmem>>, %arg5: memref<16x128xf32, #tpu.memory_space<vmem>>) attributes {dimension_semantics = [#tpu.dimension_semantics<parallel>], iteration_bounds = array<i64: 1>, scalar_prefetch = 0 : i64, scratch_operands = 0 : i64, tpu.core_type = #tpu.core_type<tc>, window_params = [{transform_indices = @transform_0, window_bounds = array<i64: 16, 128>}, {pipeline_mode = #tpu.pipeline_mode<synchronous>, transform_indices = @transform_1, window_bounds = array<i64: 32, 16>}, {pipeline_mode = #tpu.pipeline_mode<synchronous>, transform_indices = @transform_2, window_bounds = array<i64: 16, 32>}, {transform_indices = @transform_3, window_bounds = array<i64: 16, 128>}, {transform_indices = @transform_4, window_bounds = array<i64: 16, 128>}]} {
    %c0 = arith.constant 0 : index
    %c0_0 = arith.constant 0 : index
    %0 = vector.load %arg1[%c0, %c0_0] : memref<16x128xf32, #tpu.memory_space<vmem>>, vector<16x128xf32>
    %c0_1 = arith.constant 0 : index
    %c0_2 = arith.constant 0 : index
    %1 = vector.load %arg2[%c0_1, %c0_2] : memref<32x16xf32, #tpu.memory_space<vmem>>, vector<32x16xf32>
    %c0_3 = arith.constant 0 : index
    %c0_4 = arith.constant 0 : index
    %2 = vector.load %arg3[%c0_3, %c0_4] : memref<16x32xf32, #tpu.memory_space<vmem>>, vector<16x32xf32>
    %cst = arith.constant dense<0.000000e+00> : vector<32x128xf32>
    %3 = tpu.matmul %1, %0, %cst {dimension_numbers = #tpu.dot_dimension_numbers<[1], [0], [0], [1], [0, 0, 1, 1], [], []>} : vector<32x16xf32>, vector<16x128xf32>, vector<32x128xf32> -> vector<32x128xf32>
    %4 = vector.extract_strided_slice %3 {offsets = [0, 0], sizes = [16, 128], strides = [1, 1]} : vector<32x128xf32> to vector<16x128xf32>
    %5 = vector.extract_strided_slice %3 {offsets = [16, 0], sizes = [16, 128], strides = [1, 1]} : vector<32x128xf32> to vector<16x128xf32>
    %cst_5 = arith.constant 9.99999997E-7 : f32
    %6 = vector.broadcast %cst_5 : f32 to vector<16x128xf32>
    %7 = arith.addf %4, %6 : vector<16x128xf32>
    %8 = arith.mulf %7, %7 : vector<16x128xf32>
    %cst_6 = arith.constant 9.99999997E-7 : f32
    %9 = vector.broadcast %cst_6 : f32 to vector<16x128xf32>
    %10 = arith.addf %5, %9 : vector<16x128xf32>
    %11 = arith.mulf %10, %10 : vector<16x128xf32>
    %12 = arith.addf %8, %11 : vector<16x128xf32>
    %13 = tpu.iota {dimensions = array<i32: 0>} : vector<16x128xi32>
    %c9_i32 = arith.constant 9 : i32
    %14 = vector.broadcast %c9_i32 : i32 to vector<16x128xi32>
    %15 = arith.cmpi slt, %13, %14 : vector<16x128xi32>
    %cst_7 = arith.constant 0xFF800000 : f32
    %16 = vector.broadcast %cst_7 : f32 to vector<16x128xf32>
    %17 = arith.select %15, %12, %16 : vector<16x128xi1>, vector<16x128xf32>
    %cst_8 = arith.constant 0.000000e+00 : f32
    %18 = vector.broadcast %cst_8 : f32 to vector<16x128xf32>
    %cst_9 = arith.constant dense<0xFF800000> : vector<128xf32>
    %19 = vector.multi_reduction <maximumf>, %17, %cst_9 [0] : vector<16x128xf32> to vector<128xf32>
    %20 = vector.shape_cast %19 : vector<128xf32> to vector<1x128xf32>
    %21 = vector.broadcast %20 : vector<1x128xf32> to vector<16x128xf32>
    %22 = arith.cmpf oeq, %17, %21 : vector<16x128xf32>
    %c16_i32 = arith.constant 16 : i32
    %23 = vector.broadcast %c16_i32 : i32 to vector<16x128xi32>
    %24 = arith.select %22, %13, %23 : vector<16x128xi1>, vector<16x128xi32>
    %cst_10 = arith.constant dense<2147483647> : vector<128xi32>
    %25 = vector.multi_reduction <minsi>, %24, %cst_10 [0] : vector<16x128xi32> to vector<128xi32>
    %26 = vector.shape_cast %25 : vector<128xi32> to vector<1x128xi32>
    %27 = vector.broadcast %26 : vector<1x128xi32> to vector<16x128xi32>
    %28 = arith.cmpi eq, %13, %27 : vector<16x128xi32>
    %cst_11 = arith.constant 1.000000e+00 : f32
    %29 = vector.broadcast %cst_11 : f32 to vector<16x128xf32>
    %30 = arith.select %28, %29, %18 : vector<16x128xi1>, vector<16x128xf32>
    %cst_12 = arith.constant 0xFF800000 : f32
    %31 = vector.broadcast %cst_12 : f32 to vector<16x128xf32>
    %32 = arith.select %28, %31, %17 : vector<16x128xi1>, vector<16x128xf32>
    %cst_13 = arith.constant dense<0xFF800000> : vector<128xf32>
    %33 = vector.multi_reduction <maximumf>, %32, %cst_13 [0] : vector<16x128xf32> to vector<128xf32>
    %34 = vector.shape_cast %33 : vector<128xf32> to vector<1x128xf32>
    %35 = vector.broadcast %34 : vector<1x128xf32> to vector<16x128xf32>
    %36 = arith.cmpf oeq, %32, %35 : vector<16x128xf32>
    %c16_i32_14 = arith.constant 16 : i32
    %37 = vector.broadcast %c16_i32_14 : i32 to vector<16x128xi32>
    %38 = arith.select %36, %13, %37 : vector<16x128xi1>, vector<16x128xi32>
    %cst_15 = arith.constant dense<2147483647> : vector<128xi32>
    %39 = vector.multi_reduction <minsi>, %38, %cst_15 [0] : vector<16x128xi32> to vector<128xi32>
    %40 = vector.shape_cast %39 : vector<128xi32> to vector<1x128xi32>
    %41 = vector.broadcast %40 : vector<1x128xi32> to vector<16x128xi32>
    %42 = arith.cmpi eq, %13, %41 : vector<16x128xi32>
    %cst_16 = arith.constant 1.000000e+00 : f32
    %43 = vector.broadcast %cst_16 : f32 to vector<16x128xf32>
    %44 = arith.select %42, %43, %30 : vector<16x128xi1>, vector<16x128xf32>
    %cst_17 = arith.constant 0xFF800000 : f32
    %45 = vector.broadcast %cst_17 : f32 to vector<16x128xf32>
    %46 = arith.select %42, %45, %32 : vector<16x128xi1>, vector<16x128xf32>
    %cst_18 = arith.constant dense<0xFF800000> : vector<128xf32>
    %47 = vector.multi_reduction <maximumf>, %46, %cst_18 [0] : vector<16x128xf32> to vector<128xf32>
    %48 = vector.shape_cast %47 : vector<128xf32> to vector<1x128xf32>
    %49 = vector.broadcast %48 : vector<1x128xf32> to vector<16x128xf32>
    %50 = arith.cmpf oeq, %46, %49 : vector<16x128xf32>
    %c16_i32_19 = arith.constant 16 : i32
    %51 = vector.broadcast %c16_i32_19 : i32 to vector<16x128xi32>
    %52 = arith.select %50, %13, %51 : vector<16x128xi1>, vector<16x128xi32>
    %cst_20 = arith.constant dense<2147483647> : vector<128xi32>
    %53 = vector.multi_reduction <minsi>, %52, %cst_20 [0] : vector<16x128xi32> to vector<128xi32>
    %54 = vector.shape_cast %53 : vector<128xi32> to vector<1x128xi32>
    %55 = vector.broadcast %54 : vector<1x128xi32> to vector<16x128xi32>
    %56 = arith.cmpi eq, %13, %55 : vector<16x128xi32>
    %cst_21 = arith.constant 1.000000e+00 : f32
    %57 = vector.broadcast %cst_21 : f32 to vector<16x128xf32>
    %58 = arith.select %56, %57, %44 : vector<16x128xi1>, vector<16x128xf32>
    %59 = tpu.concatenate %58, %58 in 0 : vector<16x128xf32>, vector<16x128xf32> -> vector<32x128xf32>
    %60 = arith.mulf %3, %59 : vector<32x128xf32>
    %cst_22 = arith.constant dense<0.000000e+00> : vector<16x128xf32>
    %61 = tpu.matmul %2, %60, %cst_22 {dimension_numbers = #tpu.dot_dimension_numbers<[1], [0], [0], [1], [0, 0, 1, 1], [], []>} : vector<16x32xf32>, vector<32x128xf32>, vector<16x128xf32> -> vector<16x128xf32>
    %c0_23 = arith.constant 0 : index
    %c0_24 = arith.constant 0 : index
    %62 = vector.load %arg4[%c0_23, %c0_24] : memref<16x128xf32, #tpu.memory_space<vmem>>, vector<16x128xf32>
    tpu.vector_store %arg4[%c0_23, %c0_24], %61 {strides = array<i32>} : memref<16x128xf32, #tpu.memory_space<vmem>>, vector<16x128xf32>,
    %63 = arith.subf %0, %61 : vector<16x128xf32>
    %c0_25 = arith.constant 0 : index
    %c0_26 = arith.constant 0 : index
    %64 = vector.load %arg5[%c0_25, %c0_26] : memref<16x128xf32, #tpu.memory_space<vmem>>, vector<16x128xf32>
    tpu.vector_store %arg5[%c0_25, %c0_26], %63 {strides = array<i32>} : memref<16x128xf32, #tpu.memory_space<vmem>>, vector<16x128xf32>,
    return
  }
  func.func @transform_0(%arg0: i32) -> (i32, i32) {
    %c0_i32 = arith.constant 0 : i32
    %c0_i32_0 = arith.constant 0 : i32
    return %c0_i32, %arg0 : i32, i32
  }
  func.func @transform_1(%arg0: i32) -> (i32, i32) {
    %c0_i32 = arith.constant 0 : i32
    %c0_i32_0 = arith.constant 0 : i32
    %c0_i32_1 = arith.constant 0 : i32
    return %c0_i32, %c0_i32_0 : i32, i32
  }
  func.func @transform_2(%arg0: i32) -> (i32, i32) {
    %c0_i32 = arith.constant 0 : i32
    %c0_i32_0 = arith.constant 0 : i32
    %c0_i32_1 = arith.constant 0 : i32
    return %c0_i32, %c0_i32_0 : i32, i32
  }
  func.func @transform_3(%arg0: i32) -> (i32, i32) {
    %c0_i32 = arith.constant 0 : i32
    %c0_i32_0 = arith.constant 0 : i32
    return %c0_i32, %arg0 : i32, i32
  }
  func.func @transform_4(%arg0: i32) -> (i32, i32) {
    %c0_i32 = arith.constant 0 : i32
    %c0_i32_0 = arith.constant 0 : i32
    return %c0_i32, %arg0 : i32, i32
  }
}

</mosaic_0001>

<llo_original>
// kernel: tpu_custom_call.1
$region0: #{tpu_custom_call.1}
  #allocation0 [shape = 'u32[]', space=smem, size = 0x4, offset = 0x4, fixed_abs, tag = 'smem constant byte address 0x4 - core index']
  #allocation1 [shape = 'u32[72,128]{1,0:T(1,128)}', space=vmem, size = 0x9000, scoped, tag = 'internal scratch']
  %s0 = inlined_call_operand.vmem [shape: f32[16,128], index: 0, kind: input, shape index: {}]
  %s1 = inlined_call_operand.vmem [shape: f32[32,16], index: 1, kind: input, shape index: {}]
  %s2 = inlined_call_operand.vmem [shape: f32[16,32], index: 2, kind: input, shape index: {}]
  %s3 = inlined_call_operand.hbm [shape: f32[16,128], index: 3, kind: output, shape index: {0}]
  %s4 = inlined_call_operand.hbm [shape: f32[16,128], index: 4, kind: output, shape index: {1}]
  %5 = xla_tuple %s3, %s4
  %s6 = sld [smem:[#allocation0]]
  $region30: #{tpu_custom_call.1} parent=0
    _
  %s8 = ssub.s32 1, %s6
  %s9 = scalar_select 0, %s8, %s6
  $region1: #{tpu_custom_call.1} parent=0
    #allocation2 [shape = 'u8[8192]{0}', space=vmem, size = 0x2000, scoped, tag = 'output window, operand 0, single buffered']
    #allocation3 [shape = 's32[1]{0}', space=sflag, size = 0x4, scoped, tag = 'scoped memory for tpu_custom_call.1']
    #allocation4 [shape = 'u8[8192]{0}', space=vmem, size = 0x2000, scoped, tag = 'output window, operand 1, single buffered']
    #allocation5 [shape = 's32[1]{0}', space=sflag, size = 0x4, scoped, tag = 'scoped memory for tpu_custom_call.1']
    %10 = vsyncpa [#allocation3], 0
    %11 = vsyncpa [#allocation5], 0
    // Predicated region
    $region2: #{tpu_custom_call.1} parent=1 // pred_check
      _
    $region3: #{tpu_custom_call.1} parent=1 // pred_check_branch
      %13 = sbr.rel (0) target = $region5
    $region4: #{tpu_custom_call.1} parent=1 // pred_region
      _
    $region5: #{tpu_custom_call.1} parent=1 // pred_fallthru
      _
    // Predicated region
    $region6: #{tpu_custom_call.1} parent=1 // pred_check
      _
    $region7: #{tpu_custom_call.1} parent=1 // pred_check_branch
      %15 = sbr.rel (0) target = $region9
    $region8: #{tpu_custom_call.1} parent=1 // pred_region
      _
    $region9: #{tpu_custom_call.1} parent=1 // pred_fallthru
      _
    // Predicated region
    $region10: #{tpu_custom_call.1} parent=1 // pred_check
      _
    $region11: #{tpu_custom_call.1} parent=1 // pred_check_branch
      %17 = sbr.rel (0) target = $region13
    $region12: #{tpu_custom_call.1} parent=1 // pred_region
      _
    $region13: #{tpu_custom_call.1} parent=1 // pred_fallthru
      _
    %v18 = vld [vmem:[%s0] sm:$0xff]
    %v19 = vld [vmem:[%s0 + $0x8] sm:$0xff]
    %v20 = vld [vmem:[%s1] sm:$0xff]
    %v21 = vld [vmem:[%s1 + $0x8] sm:$0xff]
    %v22 = vld [vmem:[%s1 + $0x10] sm:$0xff]
    %v23 = vld [vmem:[%s1 + $0x18] sm:$0xff]
    %v24 = vld [vmem:[%s2] sm:$0xff]
    %v25 = vld [vmem:[%s2 + $0x8] sm:$0xff]
    %vm26 = vcmask 130048
    %v28 = vsel %vm26, %v20, 0
    %v31 = vsel %vm26, %v21, 0
    %v34 = vsel %vm26, %v22, 0
    %v37 = vsel %vm26, %v23, 0
    %39 = vmatpush.msra.mxu0 0.0
    %40 = vmatpush.msra.mxu0 0.0
    %41 = vmatpush.msra.mxu0 0.0
    %42 = vmatpush.msra.mxu0 0.0
    %43 = vmatpush.msra.mxu0 0.0
    %44 = vmatpush.msra.mxu0 0.0
    %45 = vmatpush.msra.mxu0 0.0
    %46 = vmatpush.msra.mxu0 0.0
    %47 = vmatpush.msra.mxu0 0.0
    %48 = vmatpush.msra.mxu0 0.0
    %49 = vmatpush.msra.mxu0 0.0
    %50 = vmatpush.msra.mxu0 0.0
    %51 = vmatpush.msra.mxu0 0.0
    %52 = vmatpush.msra.mxu0 0.0
    %53 = vmatpush.msra.mxu0 %v19
    %54 = vmatpush.msra.mxu0 %v18
    %55 = vmatmul.f32.gmra.mxu0 %v28
    %v56 = vpop.f32.mrf.mxu0
    %v57 = vadd.f32 0.0, %v56
    %58 = vmatmul.f32.gmra.mxu0 %v31
    %v59 = vpop.f32.mrf.mxu0
    %v60 = vadd.f32 0.0, %v59
    %61 = vmatmul.f32.gmra.mxu0 %v34
    %v62 = vpop.f32.mrf.mxu0
    %v63 = vadd.f32 0.0, %v62
    %64 = vmatmul.f32.gmra.mxu0 %v37
    %v65 = vpop.f32.mrf.mxu0
    %v66 = vadd.f32 0.0, %v65
    %67 = vdwg.mxu0
    %v68 = vadd.f32 %v57, 1e-06
    %v69 = vadd.f32 %v60, 1e-06
    %v70 = vmul.f32 %v68, %v68
    %v71 = vmul.f32 %v69, %v69
    %v72 = vadd.f32 %v63, 1e-06
    %v73 = vadd.f32 %v66, 1e-06
    %v74 = vmul.f32 %v72, %v72
    %v75 = vmul.f32 %v73, %v73
    %v76 = vadd.f32 %v70, %v74
    %v77 = vadd.f32 %v71, %v75
    %v78 = vlaneseq
    %v79 = vshrl.u32 %v78, 7
    %v80 = vadd.s32 %v79, 8
    %vm81 = vcmp.lt.s32.totalorder %v79, 9
    %vm82 = vcmp.lt.s32.totalorder %v80, 9
    %v83 = vsel %vm81, %v76, -inf
    %v84 = vsel %vm82, %v77, -inf
    %v85 = vmax.f32 %v83, %v84
    %v86 = vrot.slane %v85, 4
    %v87 = vmax.f32 %v85, %v86
    %v88 = vrot.slane %v87, 2
    %v89 = vmax.f32 %v87, %v88
    %v90 = vrot.slane %v89, 1
    %v91 = vmax.f32 %v89, %v90
    %vm92 = vcmp.eq.f32.partialorder %v83, %v91
    %vm93 = vcmp.eq.f32.partialorder %v84, %v91
    %v94 = vsel %vm92, %v79, 16
    %v95 = vsel %vm93, %v80, 16
    %vm96 = vcmp.lt.s32.totalorder %v94, %v95
    %v97 = vsel %vm96, %v94, %v95
    %v98 = vrot.slane %v97, 4
    %vm99 = vcmp.lt.s32.totalorder %v97, %v98
    %v100 = vsel %vm99, %v97, %v98
    %v101 = vrot.slane %v100, 2
    %vm102 = vcmp.lt.s32.totalorder %v100, %v101
    %v103 = vsel %vm102, %v100, %v101
    %v104 = vrot.slane %v103, 1
    %vm105 = vcmp.lt.s32.totalorder %v103, %v104
    %v106 = vsel %vm105, %v103, %v104
    %vm107 = vcmp.eq.s32.totalorder %v79, %v106
    %vm108 = vcmp.eq.s32.totalorder %v80, %v106
    %v109 = vsel %vm107, 1.0, 0.0
    %v110 = vsel %vm108, 1.0, 0.0
    %v111 = vsel %vm107, -inf, %v83
    %v112 = vsel %vm108, -inf, %v84
    %v113 = vmax.f32 %v111, %v112
    %v114 = vrot.slane %v113, 4
    %v115 = vmax.f32 %v113, %v114
    %v116 = vrot.slane %v115, 2
    %v117 = vmax.f32 %v115, %v116
    %v118 = vrot.slane %v117, 1
    %v119 = vmax.f32 %v117, %v118
    %vm120 = vcmp.eq.f32.partialorder %v111, %v119
    %vm121 = vcmp.eq.f32.partialorder %v112, %v119
    %v122 = vsel %vm120, %v79, 16
    %v123 = vsel %vm121, %v80, 16
    %vm124 = vcmp.lt.s32.totalorder %v122, %v123
    %v125 = vsel %vm124, %v122, %v123
    %v126 = vrot.slane %v125, 4
    %vm127 = vcmp.lt.s32.totalorder %v125, %v126
    %v128 = vsel %vm127, %v125, %v126
    %v129 = vrot.slane %v128, 2
    %vm130 = vcmp.lt.s32.totalorder %v128, %v129
    %v131 = vsel %vm130, %v128, %v129
    %v132 = vrot.slane %v131, 1
    %vm133 = vcmp.lt.s32.totalorder %v131, %v132
    %v134 = vsel %vm133, %v131, %v132
    %vm135 = vcmp.eq.s32.totalorder %v79, %v134
    %vm136 = vcmp.eq.s32.totalorder %v80, %v134
    %v137 = vsel %vm135, 1.0, %v109
    %v138 = vsel %vm136, 1.0, %v110
    %v139 = vsel %vm135, -inf, %v111
    %v140 = vsel %vm136, -inf, %v112
    %v141 = vmax.f32 %v139, %v140
    %v142 = vrot.slane %v141, 4
    %v143 = vmax.f32 %v141, %v142
    %v144 = vrot.slane %v143, 2
    %v145 = vmax.f32 %v143, %v144
    %v146 = vrot.slane %v145, 1
    %v147 = vmax.f32 %v145, %v146
    %vm148 = vcmp.eq.f32.partialorder %v139, %v147
    %vm149 = vcmp.eq.f32.partialorder %v140, %v147
    %v150 = vsel %vm148, %v79, 16
    %v151 = vsel %vm149, %v80, 16
    %vm152 = vcmp.lt.s32.totalorder %v150, %v151
    %v153 = vsel %vm152, %v150, %v151
    %v154 = vrot.slane %v153, 4
    %vm155 = vcmp.lt.s32.totalorder %v153, %v154
    %v156 = vsel %vm155, %v153, %v154
    %v157 = vrot.slane %v156, 2
    %vm158 = vcmp.lt.s32.totalorder %v156, %v157
    %v159 = vsel %vm158, %v156, %v157
    %v160 = vrot.slane %v159, 1
    %vm161 = vcmp.lt.s32.totalorder %v159, %v160
    %v162 = vsel %vm161, %v159, %v160
    %vm163 = vcmp.eq.s32.totalorder %v79, %v162
    %vm164 = vcmp.eq.s32.totalorder %v80, %v162
    %v165 = vsel %vm163, 1.0, %v137
    %v166 = vsel %vm164, 1.0, %v138
    %v167 = vmul.f32 %v57, %v165
    %v168 = vmul.f32 %v60, %v166
    %v169 = vmul.f32 %v63, %v165
    %v170 = vmul.f32 %v66, %v166
    %vm171 = vcmask 261120
    %v173 = vsel %vm171, %v24, 0
    %v176 = vsel %vm171, %v25, 0
    %178 = vmatpush.msra.mxu0 0.0
    %179 = vmatpush.msra.mxu0 0.0
    %180 = vmatpush.msra.mxu0 0.0
    %181 = vmatpush.msra.mxu0 0.0
    %182 = vmatpush.msra.mxu0 0.0
    %183 = vmatpush.msra.mxu0 0.0
    %184 = vmatpush.msra.mxu0 0.0
    %185 = vmatpush.msra.mxu0 0.0
    %186 = vmatpush.msra.mxu0 0.0
    %187 = vmatpush.msra.mxu0 0.0
    %188 = vmatpush.msra.mxu0 0.0
    %189 = vmatpush.msra.mxu0 0.0
    %190 = vmatpush.msra.mxu0 %v170
    %191 = vmatpush.msra.mxu0 %v169
    %192 = vmatpush.msra.mxu0 %v168
    %193 = vmatpush.msra.mxu0 %v167
    %194 = vmatmul.f32.gmra.mxu0 %v173
    %v195 = vpop.f32.mrf.mxu0
    %v196 = vadd.f32 0.0, %v195
    %197 = vmatmul.f32.gmra.mxu0 %v176
    %v198 = vpop.f32.mrf.mxu0
    %v199 = vadd.f32 0.0, %v198
    %200 = vdwg.mxu0
    %201 = vst [vmem:[#allocation2] sm:$0xff] %v196
    %202 = vst [vmem:[#allocation2 + $0x8] sm:$0xff] %v199
    %v203 = vsub.f32 %v18, %v196
    %v204 = vsub.f32 %v19, %v199
    %205 = vst [vmem:[#allocation4] sm:$0xff] %v203
    %206 = vst [vmem:[#allocation4 + $0x8] sm:$0xff] %v204
    // Predicated region
    $region14: #{tpu_custom_call.1} parent=1 // pred_check
      _
    $region15: #{tpu_custom_call.1} parent=1 // pred_check_branch
      %208 = sbr.rel (0) target = $region17
    $region16: #{tpu_custom_call.1} parent=1 // pred_region
      %210 = vsyncadd [#allocation3], 0
      %s211 = sshll.u32 [#allocation2], 4
      %s212 = int_to_ptr.vmem [resolvable:$true] %s211
      %s213 = sshll.u32 %s3, 4
      %s214 = int_to_ptr.hbm [resolvable:$true] %s213
      %219 = dma.vmem_to_hbm [thread:$0]  %s212, 256, %s214, [#allocation3], 128, 128, 8
    $region17: #{tpu_custom_call.1} parent=1 // pred_fallthru
      _
    // Predicated region
    $region18: #{tpu_custom_call.1} parent=1 // pred_check
      _
    $region19: #{tpu_custom_call.1} parent=1 // pred_check_branch
      %221 = sbr.rel (0) target = $region21
    $region20: #{tpu_custom_call.1} parent=1 // pred_region
      %223 = vsyncadd [#allocation5], 0
      %s224 = sshll.u32 [#allocation4], 4
      %s225 = int_to_ptr.vmem [resolvable:$true] %s224
      %s226 = sshll.u32 %s4, 4
      %s227 = int_to_ptr.hbm [resolvable:$true] %s226
      %232 = dma.vmem_to_hbm [thread:$0]  %s225, 256, %s227, [#allocation5], 128, 128, 8
    $region21: #{tpu_custom_call.1} parent=1 // pred_fallthru
      _
    // Predicated region
    $region22: #{tpu_custom_call.1} parent=1 // pred_check
      _
    $region23: #{tpu_custom_call.1} parent=1 // pred_check_branch
      %234 = sbr.rel (0) target = $region25
    $region24: #{tpu_custom_call.1} parent=1 // pred_region
      %236 = dma.done [#allocation3], 256
    $region25: #{tpu_custom_call.1} parent=1 // pred_fallthru
      _
    // Predicated region
    $region26: #{tpu_custom_call.1} parent=1 // pred_check
      _
    $region27: #{tpu_custom_call.1} parent=1 // pred_check_branch
      %238 = sbr.rel (0) target = $region29
    $region28: #{tpu_custom_call.1} parent=1 // pred_region
      %240 = dma.done [#allocation5], 256
    $region29: #{tpu_custom_call.1} parent=1 // pred_fallthru
      _
    %241 = vsyncpa [#allocation3], 1
    %242 = vsyncpa [#allocation5], 1

</llo_original>
